<compile_context>
chip_gen: v6e
topology: v6e:2x2x1
jax: 0.10.0
libtpu: 0.0.40
codegen_flags: <defaults>
</compile_context>

<pallas_src>
import functools

import jax
import jax.numpy as jnp
from jax import lax
from jax.experimental import pallas as pl
from jax.experimental.pallas import tpu as pltpu


def _round_up(x, m):
    return ((x + m - 1) // m) * m


# Contract dim 1 of lhs with dim 1 of rhs: x[tm,tk] @ W[tn,tk].T -> [tm,tn].
_NT_DIM_NUMBERS = (((1,), (1,)), ((), ()))


def _grad_linear_kernel_accum_out(x_ref, w_ref, b_ref, o_ref):
    """f32 output: accumulate directly into the k-resident output tile."""
    k = pl.program_id(2)

    @pl.when(k == 0)
    def _init():
        o_ref[...] = jnp.zeros_like(o_ref)

    o_ref[...] += lax.dot_general(
        x_ref[...], w_ref[...],
        dimension_numbers=_NT_DIM_NUMBERS,
        preferred_element_type=jnp.float32)

    @pl.when(k == pl.num_programs(2) - 1)
    def _finalize():
        # Bias added exactly once per output tile, broadcast over rows.
        o_ref[...] += b_ref[...]


def _grad_linear_kernel_scratch(x_ref, w_ref, b_ref, o_ref, acc_ref):
    """Generic path (non-f32 output dtype): f32 scratch accumulator."""
    k = pl.program_id(2)

    @pl.when(k == 0)
    def _init():
        acc_ref[...] = jnp.zeros_like(acc_ref)

    acc_ref[...] += lax.dot_general(
        x_ref[...], w_ref[...],
        dimension_numbers=_NT_DIM_NUMBERS,
        preferred_element_type=jnp.float32)

    @pl.when(k == pl.num_programs(2) - 1)
    def _finalize():
        o_ref[...] = (acc_ref[...] + b_ref[...]).astype(o_ref.dtype)


# Conservative double-buffered working-set budget: fits comfortably inside
# v7x's 64 MiB physical VMEM as well as v5e/v6e's 128 MiB.
_VMEM_SOFT_BUDGET = 24 << 20


@functools.partial(
    jax.jit,
    static_argnames=("use_bf16_mxu", "tm_max", "tn_max", "tk_max"))
def grad_linear(x, weights, bias, *, use_bf16_mxu=True,
                tm_max=512, tn_max=512, tk_max=1024):
    """Pallas TPU equivalent of GradLinear.forward: y = x @ W.T + b.

    use_bf16_mxu=True (default) feeds the MXU bf16 operands with f32
    accumulation; set False for strict f32 operand semantics.
    """
    M, K = x.shape
    N, K2 = weights.shape
    assert K == K2, "in_features mismatch"
    assert bias.shape == (N,)
    out_dtype = x.dtype

    op_dtype = jnp.bfloat16 if use_bf16_mxu else x.dtype
    op_size = jnp.dtype(op_dtype).itemsize
    out_size = jnp.dtype(out_dtype).itemsize

    # ---- tile-size heuristic -------------------------------------------
    # Sublane packing granule for the operand dtype (f32: 8 rows, bf16: 16).
    m_gran = 8 * (4 // op_size)
    tm = min(tm_max, _round_up(M, m_gran))
    # Small-batch (weight-streaming) regime: grow the lane-dense N/K tiles
    # instead of tm so each grid step moves a large W slab.
    if tm <= 64:
        tn_max = max(tn_max, 1024)
        tk_max = max(tk_max, 2048)
    tn = min(tn_max, _round_up(N, 128))
    tk = min(tk_max, _round_up(K, 128))

    use_scratch = out_dtype != jnp.float32

    def vmem_need(tm_, tn_, tk_):
        need = 2 * (tm_ * tk_ + tn_ * tk_) * op_size   # double-buffered x, W
        need += 2 * tm_ * tn_ * out_size               # double-buffered out
        need += 2 * tn_ * 4                            # bias
        if use_scratch:
            need += tm_ * tn_ * 4
        return need

    # Shrink K, then N, then M tiles (keeping (8,128)/sublane alignment)
    # until the double-buffered working set fits the budget.
    while vmem_need(tm, tn, tk) > _VMEM_SOFT_BUDGET and tk > 512:
        tk = max(512, ((tk // 2) // 128) * 128)
    while vmem_need(tm, tn, tk) > _VMEM_SOFT_BUDGET and tn > 256:
        tn = max(256, ((tn // 2) // 128) * 128)
    while vmem_need(tm, tn, tk) > _VMEM_SOFT_BUDGET and tm > 128:
        tm = max(128, ((tm // 2) // m_gran) * m_gran)

    M_p = _round_up(M, tm)
    N_p = _round_up(N, tn)
    K_p = _round_up(K, tk)

    # Operands: x [M,K]; W kept in its natural [N,K] layout (no HBM-level
    # transpose); bias as a [1,N] f32 row for lane-dense broadcast.
    x_op = x.astype(op_dtype)
    w_op = weights.astype(op_dtype)
    b_op = bias.reshape(1, N).astype(jnp.float32)

    # Zero-pad to tile multiples (zeros are neutral for matmul / bias).
    if (M_p, K_p) != (M, K):
        x_op = jnp.pad(x_op, ((0, M_p - M), (0, K_p - K)))
    if (N_p, K_p) != (N, K):
        w_op = jnp.pad(w_op, ((0, N_p - N), (0, K_p - K)))
    if N_p != N:
        b_op = jnp.pad(b_op, ((0, 0), (0, N_p - N)))

    gm, gn, gk = M_p // tm, N_p // tn, K_p // tk

    # Put the larger independent axis first so megacore (v7x) sharding always
    # has work to split even when the other axis collapses to a single tile.
    if gn >= gm:
        grid = (gn, gm, gk)
        x_map = lambda j, i, k: (i, k)
        w_map = lambda j, i, k: (j, k)
        b_map = lambda j, i, k: (0, j)
        o_map = lambda j, i, k: (i, j)
    else:
        grid = (gm, gn, gk)
        x_map = lambda i, j, k: (i, k)
        w_map = lambda i, j, k: (j, k)
        b_map = lambda i, j, k: (0, j)
        o_map = lambda i, j, k: (i, j)

    # Real HBM traffic: x is re-read once per N tile, W once per M tile.
    cost = pl.CostEstimate(
        flops=2 * M_p * N_p * K_p,
        transcendentals=0,
        bytes_accessed=(M_p * K_p * op_size * gn
                        + N_p * K_p * op_size * gm
                        + M_p * N_p * out_size
                        + N_p * 4 * gm),
    )

    need = vmem_need(tm, tn, tk)
    vmem_limit = int(min(max(need + (4 << 20), 16 << 20), 48 << 20))

    kernel = _grad_linear_kernel_scratch if use_scratch else _grad_linear_kernel_accum_out
    scratch_shapes = [pltpu.VMEM((tm, tn), jnp.float32)] if use_scratch else []

    out_p = pl.pallas_call(
        kernel,
        out_shape=jax.ShapeDtypeStruct((M_p, N_p), out_dtype),
        grid=grid,
        in_specs=[
            pl.BlockSpec((tm, tk), x_map),   # x tile
            pl.BlockSpec((tn, tk), w_map),   # W tile (natural [N, K] layout)
            pl.BlockSpec((1, tn), b_map),    # bias tile
        ],
        out_specs=pl.BlockSpec((tm, tn), o_map),
        scratch_shapes=scratch_shapes,
        compiler_params=pltpu.CompilerParams(
            dimension_semantics=("parallel", "parallel", "arbitrary"),
            vmem_limit_bytes=vmem_limit,
            allow_input_fusion=[True, True, True],
        ),
        cost_estimate=cost,
    )(x_op, w_op, b_op)

    return out_p[:M, :N]


if __name__ == "__main__":
    # Deterministic parameter init mirroring nn.Linear(in_features, out_features):
    #   W ~ U(-1/sqrt(in), 1/sqrt(in)), shape [out, in]
    #   b ~ U(-1/sqrt(in), 1/sqrt(in)), shape [out]
    key = jax.random.PRNGKey(0)

    # --- Small test (module-scale shapes) ---------------------------------
    in_features, out_features, batch = 32, 16, 8
    kx, kw, kb, key = jax.random.split(key, 4)
    bound = 1.0 / (in_features ** 0.5)
    weights = jax.random.uniform(
        kw, (out_features, in_features), jnp.float32, -bound, bound)
    bias = jax.random.uniform(
        kb, (out_features,), jnp.float32, -bound, bound)
    x = jax.random.normal(kx, (batch, in_features), jnp.float32)

    y_ref = jnp.matmul(x, weights.T, precision=jax.lax.Precision.HIGHEST) + bias

    # Strict f32 operand path: tight tolerance.
    y_f32 = jax.block_until_ready(grad_linear(x, weights, bias, use_bf16_mxu=False))
    assert y_f32.shape == (batch, out_features)
    assert jnp.allclose(y_f32, y_ref, atol=1e-5, rtol=1e-5), "f32 small-shape mismatch"

    # Default bf16-MXU path (f32 accumulation): looser tolerance.
    y_bf16 = jax.block_until_ready(grad_linear(x, weights, bias))
    err = float(jnp.max(jnp.abs(y_bf16 - y_ref)) / (jnp.max(jnp.abs(y_ref)) + 1e-6))
    assert y_bf16.shape == (batch, out_features)
    assert err < 2e-2, f"bf16 small-shape mismatch, rel_err={err}"

    # --- Multi-tile test (exercises M/N/K tiling, accumulation, bias-once) --
    in2, out2, batch2 = 640, 384, 320
    kx2, kw2, kb2, key = jax.random.split(key, 4)
    bound2 = 1.0 / (in2 ** 0.5)
    weights2 = jax.random.uniform(kw2, (out2, in2), jnp.float32, -bound2, bound2)
    bias2 = jax.random.uniform(kb2, (out2,), jnp.float32, -bound2, bound2)
    x2 = jax.random.normal(kx2, (batch2, in2), jnp.float32)
    y2_ref = jnp.matmul(x2, weights2.T, precision=jax.lax.Precision.HIGHEST) + bias2

    # Small tile caps force a real 3x3x3 grid; strict f32 path + tight
    # tolerance so accumulation-order / bias-once / padding bugs aren't masked.
    y2_f32 = jax.block_until_ready(
        grad_linear(x2, weights2, bias2, use_bf16_mxu=False,
                    tm_max=128, tn_max=128, tk_max=256))
    assert y2_f32.shape == (batch2, out2)
    rel = float(jnp.max(jnp.abs(y2_f32 - y2_ref)) / (jnp.max(jnp.abs(y2_ref)) + 1e-6))
    assert rel < 1e-4, f"f32 multi-tile mismatch, rel_err={rel}"

    # Default path (bf16 MXU, large tiles) on the same problem.
    y2_bf16 = jax.block_until_ready(grad_linear(x2, weights2, bias2))
    assert y2_bf16.shape == (batch2, out2)
    rel_b = float(jnp.max(jnp.abs(y2_bf16 - y2_ref)) / (jnp.max(jnp.abs(y2_ref)) + 1e-6))
    assert rel_b < 2e-2, f"bf16 multi-tile mismatch, rel_err={rel_b}"

    print("KERNEL_OK")
</pallas_src>

<mosaic_0001>
module attributes {stable_mosaic.version = 11 : i64} {
  func.func @_grad_linear_kernel_accum_out(%arg0: i32, %arg1: i32, %arg2: i32, %arg3: memref<8x128xf32, #tpu.memory_space<vmem>>, %arg4: memref<128x128xf32, #tpu.memory_space<vmem>>, %arg5: memref<1x128xf32, #tpu.memory_space<vmem>>, %arg6: memref<8x128xf32, #tpu.memory_space<vmem>>) attributes {dimension_semantics = [#tpu.dimension_semantics<parallel>, #tpu.dimension_semantics<parallel>, #tpu.dimension_semantics<arbitrary>], iteration_bounds = array<i64: 1, 1, 1>, scalar_prefetch = 0 : i64, scratch_operands = 0 : i64, tpu.core_type = #tpu.core_type<tc>, window_params = [{transform_indices = @transform_0, window_bounds = array<i64: 8, 128>}, {transform_indices = @transform_1, window_bounds = array<i64: 128, 128>}, {transform_indices = @transform_2, window_bounds = array<i64: 1, 128>}, {transform_indices = @transform_3, window_bounds = array<i64: 8, 128>}]} {
    %c0_i32 = arith.constant 0 : i32
    %0 = arith.cmpi eq, %arg2, %c0_i32 : i32
    %1 = arith.extui %0 : i1 to i32
    %c0_i32_0 = arith.constant 0 : i32
    %2 = arith.cmpi ne, %1, %c0_i32_0 : i32
    scf.if %2 {
      %cst_10 = arith.constant 0.000000e+00 : f32
      %12 = vector.broadcast %cst_10 : f32 to vector<8x128xf32>
      %c0_11 = arith.constant 0 : index
      %c0_12 = arith.constant 0 : index
      %13 = vector.load %arg6[%c0_11, %c0_12] : memref<8x128xf32, #tpu.memory_space<vmem>>, vector<8x128xf32>
      tpu.vector_store %arg6[%c0_11, %c0_12], %12 {strides = array<i32>} : memref<8x128xf32, #tpu.memory_space<vmem>>, vector<8x128xf32>,
    } else {
    }
    %c0 = arith.constant 0 : index
    %c0_1 = arith.constant 0 : index
    %3 = vector.load %arg6[%c0, %c0_1] : memref<8x128xf32, #tpu.memory_space<vmem>>, vector<8x128xf32>
    %c0_2 = arith.constant 0 : index
    %c0_3 = arith.constant 0 : index
    %4 = vector.load %arg3[%c0_2, %c0_3] : memref<8x128xf32, #tpu.memory_space<vmem>>, vector<8x128xf32>
    %c0_4 = arith.constant 0 : index
    %c0_5 = arith.constant 0 : index
    %5 = vector.load %arg4[%c0_4, %c0_5] : memref<128x128xf32, #tpu.memory_space<vmem>>, vector<128x128xf32>
    %cst = arith.constant dense<0.000000e+00> : vector<8x128xf32>
    %6 = tpu.matmul %4, %5, %cst {dimension_numbers = #tpu.dot_dimension_numbers<[1], [1], [0], [0], [0, 0, 1, 0], [], []>} : vector<8x128xf32>, vector<128x128xf32>, vector<8x128xf32> -> vector<8x128xf32>
    %7 = arith.addf %3, %6 : vector<8x128xf32>
    %c0_6 = arith.constant 0 : index
    %c0_7 = arith.constant 0 : index
    %8 = vector.load %arg6[%c0_6, %c0_7] : memref<8x128xf32, #tpu.memory_space<vmem>>, vector<8x128xf32>
    tpu.vector_store %arg6[%c0_6, %c0_7], %7 {strides = array<i32>} : memref<8x128xf32, #tpu.memory_space<vmem>>, vector<8x128xf32>,
    %c0_i32_8 = arith.constant 0 : i32
    %9 = arith.cmpi eq, %arg2, %c0_i32_8 : i32
    %10 = arith.extui %9 : i1 to i32
    %c0_i32_9 = arith.constant 0 : i32
    %11 = arith.cmpi ne, %10, %c0_i32_9 : i32
    scf.if %11 {
      %c0_10 = arith.constant 0 : index
      %c0_11 = arith.constant 0 : index
      %12 = vector.load %arg6[%c0_10, %c0_11] : memref<8x128xf32, #tpu.memory_space<vmem>>, vector<8x128xf32>
      %c0_12 = arith.constant 0 : index
      %c0_13 = arith.constant 0 : index
      %13 = vector.load %arg5[%c0_12, %c0_13] : memref<1x128xf32, #tpu.memory_space<vmem>>, vector<1x128xf32>
      %14 = vector.broadcast %13 : vector<1x128xf32> to vector<8x128xf32>
      %15 = arith.addf %12, %14 : vector<8x128xf32>
      %c0_14 = arith.constant 0 : index
      %c0_15 = arith.constant 0 : index
      %16 = vector.load %arg6[%c0_14, %c0_15] : memref<8x128xf32, #tpu.memory_space<vmem>>, vector<8x128xf32>
      tpu.vector_store %arg6[%c0_14, %c0_15], %15 {strides = array<i32>} : memref<8x128xf32, #tpu.memory_space<vmem>>, vector<8x128xf32>,
    } else {
    }
    return
  }
  func.func @transform_0(%arg0: i32, %arg1: i32, %arg2: i32) -> (i32, i32) {
    %c0_i32 = arith.constant 0 : i32
    return %arg1, %arg2 : i32, i32
  }
  func.func @transform_1(%arg0: i32, %arg1: i32, %arg2: i32) -> (i32, i32) {
    %c0_i32 = arith.constant 0 : i32
    return %arg0, %arg2 : i32, i32
  }
  func.func @transform_2(%arg0: i32, %arg1: i32, %arg2: i32) -> (i32, i32) {
    %c0_i32 = arith.constant 0 : i32
    %c0_i32_0 = arith.constant 0 : i32
    return %c0_i32, %arg0 : i32, i32
  }
  func.func @transform_3(%arg0: i32, %arg1: i32, %arg2: i32) -> (i32, i32) {
    %c0_i32 = arith.constant 0 : i32
    return %arg1, %arg0 : i32, i32
  }
}

</mosaic_0001>

<llo_original>
// kernel: grad_linear.2
$region0: #{grad_linear.2}
  #allocation0 [shape = 'u32[]', space=smem, size = 0x4, offset = 0x4, fixed_abs, tag = 'smem constant byte address 0x4 - core index']
  #allocation1 [shape = 'u32[144,128]{1,0:T(1,128)}', space=vmem, size = 0x12000, scoped, tag = 'internal scratch']
  #allocation2 [shape = 'u32[2048]{0}', space=vmem, size = 0x2000, scoped, tag = 'scoped memory for grad_linear.2']
  #allocation3 [shape = 'u32[2048]{0}', space=vmem, size = 0x2000, scoped, tag = 'scoped memory for grad_linear.2']
  #allocation4 [shape = 'u32[2048]{0}', space=vmem, size = 0x2000, scoped, tag = 'scoped memory for grad_linear.2']
  #allocation5 [shape = 'u32[2048]{0}', space=vmem, size = 0x2000, scoped, tag = 'scoped memory for grad_linear.2']
  #allocation6 [shape = 'u32[2048]{0}', space=vmem, size = 0x2000, scoped, tag = 'scoped memory for grad_linear.2']
  #allocation7 [shape = 'u32[2048]{0}', space=vmem, size = 0x2000, scoped, tag = 'scoped memory for grad_linear.2']
  #allocation8 [shape = 'u32[2048]{0}', space=vmem, size = 0x2000, scoped, tag = 'scoped memory for grad_linear.2']
  #allocation9 [shape = 'u32[2048]{0}', space=vmem, size = 0x2000, scoped, tag = 'scoped memory for grad_linear.2']
  #allocation10 [shape = 'u32[2048]{0}', space=vmem, size = 0x2000, scoped, tag = 'scoped memory for grad_linear.2']
  #allocation11 [shape = 'u32[2048]{0}', space=vmem, size = 0x2000, scoped, tag = 'scoped memory for grad_linear.2']
  #allocation12 [shape = 'u32[2048]{0}', space=vmem, size = 0x2000, scoped, tag = 'scoped memory for grad_linear.2']
  #allocation13 [shape = 'u32[2048]{0}', space=vmem, size = 0x2000, scoped, tag = 'scoped memory for grad_linear.2']
  #allocation14 [shape = 'u32[2048]{0}', space=vmem, size = 0x2000, scoped, tag = 'scoped memory for grad_linear.2']
  #allocation15 [shape = 'u32[2048]{0}', space=vmem, size = 0x2000, scoped, tag = 'scoped memory for grad_linear.2']
  #allocation16 [shape = 'u32[2048]{0}', space=vmem, size = 0x2000, scoped, tag = 'scoped memory for grad_linear.2']
  %s0 = inlined_call_operand.hbm [shape: f32[16,32], index: 0, kind: input, shape index: {}]
  %s1 = inlined_call_operand.<no memory space> [shape: f32[], index: 1, kind: input, shape index: {}]
  %s2 = inlined_call_operand.hbm [shape: f32[8,32], index: 2, kind: input, shape index: {}]
  %s3 = inlined_call_operand.vmem [shape: f32[1,16], index: 3, kind: input, shape index: {}]
  %s4 = inlined_call_operand.hbm [shape: f32[8,128], index: 4, kind: output, shape index: {}]
  %s5 = sld [smem:[#allocation0]]
  $region38: #{grad_linear.2} parent=0
    _
  %s7 = ssub.s32 1, %s5
  %s8 = scalar_select 0, %s7, %s5
  %v9 = vstv %s1
  %v10 = vstv %s1
  %v11 = vstv %s1
  $region1: #{grad_linear.2} parent=0
    #allocation17 [shape = 'u8[4096]{0}', space=vmem, size = 0x1000, scoped, tag = 'operand span for operand 2']
    #allocation18 [shape = 's32[1]{0}', space=sflag, size = 0x4, scoped, tag = 'scoped memory for grad_linear.2']
    #allocation19 [shape = 's32[1]{0}', space=sflag, size = 0x4, scoped, tag = 'scoped memory for grad_linear.2']
    #allocation20 [shape = 'u8[8192]{0}', space=vmem, size = 0x2000, scoped, tag = 'operand span for operand 0']
    #allocation21 [shape = 's32[1]{0}', space=sflag, size = 0x4, scoped, tag = 'scoped memory for grad_linear.2']
    #allocation22 [shape = 'u8[4096]{0}', space=vmem, size = 0x1000, scoped, tag = 'output window, operand 0, single buffered']
    #allocation23 [shape = 'u8[4096]{0}', space=vmem, size = 0x1000, dematerialized = true, scoped, tag = 'FusionAdapter Buffer %fusion.2 = f32[8,128]{1,0:T(8,128)} fusion(%param_2.3, %param_1.5), kind=kLoop, calls=%fused_computation.2.clone, metadata={op_name="jit(grad_linear)/jit(_pad)/pad" stack_frame_id=8}']
    #allocation24 [shape = 'u8[65536]{0}', space=vmem, size = 0x10000, dematerialized = true, scoped, tag = 'FusionAdapter Buffer %fusion.1 = f32[128,128]{1,0:T(8,128)} fusion(%param_0.4, %param_1.5), kind=kLoop, calls=%fused_computation.1.clone, metadata={op_name="jit(grad_linear)/jit(_pad)/pad" stack_frame_id=9}']
    #allocation25 [shape = 'u8[512]{0}', space=vmem, size = 0x400, dematerialized = true, scoped, tag = 'FusionAdapter Buffer %fusion.3 = f32[1,128]{1,0:T(1,128)} fusion(%param_3.2, %param_1.5), kind=kLoop, calls=%fused_computation.3.clone, metadata={op_name="jit(grad_linear)/jit(_pad)/pad" stack_frame_id=10}']
    %12 = vsyncpa [#allocation18], 0
    %13 = vsyncpa [#allocation21], 0
    %14 = vsyncpa [#allocation19], 0
    // Predicated region
    $region2: #{grad_linear.2} parent=1 // pred_check
      _
    $region3: #{grad_linear.2} parent=1 // pred_check_branch
      %16 = sbr.rel (0) target = $region5
    $region4: #{grad_linear.2} parent=1 // pred_region
      %s18 = ssub.s32 128, 128
      %19 = vsyncadd [#allocation18], %s18
      %s21 = sshll.u32 [#allocation17], 4
      %s22 = int_to_ptr.vmem [resolvable:$true] %s21
      %24 = dma.hbm_to_vmem [thread:$0]  %s2, 128, %s22, [#allocation18]
    $region5: #{grad_linear.2} parent=1 // pred_fallthru
      _
    // Predicated region
    $region6: #{grad_linear.2} parent=1 // pred_check
      _
    $region7: #{grad_linear.2} parent=1 // pred_check_branch
      %26 = sbr.rel (0) target = $region9
    $region8: #{grad_linear.2} parent=1 // pred_region
      %s28 = ssub.s32 256, 256
      %29 = vsyncadd [#allocation21], %s28
      %s30 = sshll.u32 [#allocation20], 4
      %s31 = int_to_ptr.vmem [resolvable:$true] %s30
      %36 = dma.hbm_to_vmem [thread:$0]  %s0, 256, %s31, [#allocation21], 128, 128, 8
    $region9: #{grad_linear.2} parent=1 // pred_fallthru
      _
    // Predicated region
    $region10: #{grad_linear.2} parent=1 // pred_check
      _
    $region11: #{grad_linear.2} parent=1 // pred_check_branch
      %38 = sbr.rel (0) target = $region13
    $region12: #{grad_linear.2} parent=1 // pred_region
      _
    $region13: #{grad_linear.2} parent=1 // pred_fallthru
      _
    // Predicated region
    $region14: #{grad_linear.2} parent=1 // pred_check
      _
    $region15: #{grad_linear.2} parent=1 // pred_check_branch
      %40 = sbr.rel (0) target = $region17
    $region16: #{grad_linear.2} parent=1 // pred_region
      %41 = dma.done [#allocation18], 128
    $region17: #{grad_linear.2} parent=1 // pred_fallthru
      _
    // Predicated region
    $region18: #{grad_linear.2} parent=1 // pred_check
      _
    $region19: #{grad_linear.2} parent=1 // pred_check_branch
      %43 = sbr.rel (0) target = $region21
    $region20: #{grad_linear.2} parent=1 // pred_region
      %44 = dma.done [#allocation21], 256
    $region21: #{grad_linear.2} parent=1 // pred_fallthru
      _
    %v45 = vld [vmem:[#allocation17] sm:$0xff]
    %v46 = vlaneseq
    %v47 = vand.u32 %v46, 127
    %vm49 = vcmp.lt.s32.totalorder %v47, 32
    %v50 = vsel %vm49, %v45, %v9
    %s52 = ssub.s32 256, 1
    %53 = vst [vmem:[#allocation23] sm:%s52] %v50
    %v54 = vld [vmem:[#allocation20] sm:$0xff]
    %v55 = vlaneseq
    %v56 = vand.u32 %v55, 127
    %vm58 = vcmp.lt.s32.totalorder %v56, 32
    %v59 = vsel %vm58, %v54, %v10
    %s61 = ssub.s32 256, 1
    %62 = vst [vmem:[#allocation24] sm:%s61] %v59
    %s63 = scalar_lea.vmem [#allocation20], 8
    %v64 = vld [vmem:[%s63] sm:$0xff]
    %v65 = vlaneseq
    %v66 = vand.u32 %v65, 127
    %vm68 = vcmp.lt.s32.totalorder %v66, 32
    %v69 = vsel %vm68, %v64, %v10
    %s70 = scalar_lea.vmem [#allocation24], 8
    %s72 = ssub.s32 256, 1
    %73 = vst [vmem:[%s70] sm:%s72] %v69
    %s74 = scalar_lea.vmem [#allocation24], 16
    %s76 = ssub.s32 256, 1
    %77 = vst [vmem:[%s74] sm:%s76] %v10
    %s78 = scalar_lea.vmem [#allocation24], 24
    %s80 = ssub.s32 256, 1
    %81 = vst [vmem:[%s78] sm:%s80] %v10
    %s82 = scalar_lea.vmem [#allocation24], 32
    %s84 = ssub.s32 256, 1
    %85 = vst [vmem:[%s82] sm:%s84] %v10
    %s86 = scalar_lea.vmem [#allocation24], 40
    %s88 = ssub.s32 256, 1
    %89 = vst [vmem:[%s86] sm:%s88] %v10
    %s90 = scalar_lea.vmem [#allocation24], 48
    %s92 = ssub.s32 256, 1
    %93 = vst [vmem:[%s90] sm:%s92] %v10
    %s94 = scalar_lea.vmem [#allocation24], 56
    %s96 = ssub.s32 256, 1
    %97 = vst [vmem:[%s94] sm:%s96] %v10
    %s98 = scalar_lea.vmem [#allocation24], 64
    %s100 = ssub.s32 256, 1
    %101 = vst [vmem:[%s98] sm:%s100] %v10
    %s102 = scalar_lea.vmem [#allocation24], 72
    %s104 = ssub.s32 256, 1
    %105 = vst [vmem:[%s102] sm:%s104] %v10
    %s106 = scalar_lea.vmem [#allocation24], 80
    %s108 = ssub.s32 256, 1
    %109 = vst [vmem:[%s106] sm:%s108] %v10
    %s110 = scalar_lea.vmem [#allocation24], 88
    %s112 = ssub.s32 256, 1
    %113 = vst [vmem:[%s110] sm:%s112] %v10
    %s114 = scalar_lea.vmem [#allocation24], 96
    %s116 = ssub.s32 256, 1
    %117 = vst [vmem:[%s114] sm:%s116] %v10
    %s118 = scalar_lea.vmem [#allocation24], 104
    %s120 = ssub.s32 256, 1
    %121 = vst [vmem:[%s118] sm:%s120] %v10
    %s122 = scalar_lea.vmem [#allocation24], 112
    %s124 = ssub.s32 256, 1
    %125 = vst [vmem:[%s122] sm:%s124] %v10
    %s126 = scalar_lea.vmem [#allocation24], 120
    %s128 = ssub.s32 256, 1
    %129 = vst [vmem:[%s126] sm:%s128] %v10
    %v130 = vld [vmem:[%s3] sm:$0x1]
    %v131 = vlaneseq
    %v132 = vshrl.u32 %v131, 7
    %vm134 = vcmp.lt.s32.totalorder %v132, 1
    %v135 = vsel %vm134, %v130, %v11
    %v136 = vlaneseq
    %v137 = vand.u32 %v136, 127
    %vm139 = vcmp.lt.s32.totalorder %v137, 16
    %v140 = vsel %vm139, %v135, %v11
    %s142 = ssub.s32 2, 1
    %143 = vst [vmem:[#allocation25] sm:%s142] %v140
    %p144 = scmp.eq.s32.totalorder 0, 0
    // Predicated region
    $region22: #{grad_linear.2} parent=1 // pred_check
      %p145 = pneg %p144
    $region23: #{grad_linear.2} parent=1 // pred_check_branch
      %147 = sbr.rel (%p145) target = $region25
    $region24: #{grad_linear.2} parent=1 // pred_region
      %148 = vst [vmem:[#allocation22] sm:$0xff] 0.0
    $region25: #{grad_linear.2} parent=1 // pred_fallthru
      _
    %v149 = vld [vmem:[#allocation22] sm:$0xff]
    %v150 = vld [vmem:[#allocation23] sm:$0xff]
    %v151 = vld [vmem:[#allocation24] sm:$0xff]
    %v152 = vld [vmem:[#allocation24 + $0x8] sm:$0xff]
    %v153 = vld [vmem:[#allocation24 + $0x10] sm:$0xff]
    %v154 = vld [vmem:[#allocation24 + $0x18] sm:$0xff]
    %v155 = vld [vmem:[#allocation24 + $0x20] sm:$0xff]
    %v156 = vld [vmem:[#allocation24 + $0x28] sm:$0xff]
    %v157 = vld [vmem:[#allocation24 + $0x30] sm:$0xff]
    %v158 = vld [vmem:[#allocation24 + $0x38] sm:$0xff]
    %v159 = vld [vmem:[#allocation24 + $0x40] sm:$0xff]
    %v160 = vld [vmem:[#allocation24 + $0x48] sm:$0xff]
    %v161 = vld [vmem:[#allocation24 + $0x50] sm:$0xff]
    %v162 = vld [vmem:[#allocation24 + $0x58] sm:$0xff]
    %v163 = vld [vmem:[#allocation24 + $0x60] sm:$0xff]
    %v164 = vld [vmem:[#allocation24 + $0x68] sm:$0xff]
    %v165 = vld [vmem:[#allocation24 + $0x70] sm:$0xff]
    %v166 = vld [vmem:[#allocation24 + $0x78] sm:$0xff]
    %167 = vmatprep.subr.mxu0 0.0
    %168 = vmatpush1.xpose.msra.mxu0 %v166
    %169 = vmatprep.subr.mxu0 0.0
    %170 = vmatpush1.xpose.msra.mxu0 %v165
    %171 = vmatprep.subr.mxu0 0.0
    %172 = vmatpush1.xpose.msra.mxu0 %v164
    %173 = vmatprep.subr.mxu0 0.0
    %174 = vmatpush1.xpose.msra.mxu0 %v163
    %175 = vmatprep.subr.mxu0 0.0
    %176 = vmatpush1.xpose.msra.mxu0 %v162
    %177 = vmatprep.subr.mxu0 0.0
    %178 = vmatpush1.xpose.msra.mxu0 %v161
    %179 = vmatprep.subr.mxu0 0.0
    %180 = vmatpush1.xpose.msra.mxu0 %v160
    %181 = vmatprep.subr.mxu0 0.0
    %182 = vmatpush1.xpose.msra.mxu0 %v159
    %183 = vmatprep.subr.mxu0 0.0
    %184 = vmatpush1.xpose.msra.mxu0 %v158
    %185 = vmatprep.subr.mxu0 0.0
    %186 = vmatpush1.xpose.msra.mxu0 %v157
    %187 = vmatprep.subr.mxu0 0.0
    %188 = vmatpush1.xpose.msra.mxu0 %v156
    %189 = vmatprep.subr.mxu0 0.0
    %190 = vmatpush1.xpose.msra.mxu0 %v155
    %191 = vmatprep.subr.mxu0 0.0
    %192 = vmatpush1.xpose.msra.mxu0 %v154
    %193 = vmatprep.subr.mxu0 0.0
    %194 = vmatpush1.xpose.msra.mxu0 %v153
    %195 = vmatprep.subr.mxu0 0.0
    %196 = vmatpush1.xpose.msra.mxu0 %v152
    %197 = vmatprep.subr.mxu0 0.0
    %198 = vmatpush1.xpose.msra.mxu0 %v151
    %199 = vmatprep.subr.mxu0 0.0
    %200 = vmatpush2.xpose.msra.mxu0 0.0
    %201 = vmatprep.subr.mxu0 0.0
    %202 = vmatpush2.xpose.msra.mxu0 0.0
    %203 = vmatprep.subr.mxu0 0.0
    %204 = vmatpush2.xpose.msra.mxu0 0.0
    %205 = vmatprep.subr.mxu0 0.0
    %206 = vmatpush2.xpose.msra.mxu0 0.0
    %207 = vmatprep.subr.mxu0 0.0
    %208 = vmatpush2.xpose.msra.mxu0 0.0
    %209 = vmatprep.subr.mxu0 0.0
    %210 = vmatpush2.xpose.msra.mxu0 0.0
    %211 = vmatprep.subr.mxu0 0.0
    %212 = vmatpush2.xpose.msra.mxu0 0.0
    %213 = vmatprep.subr.mxu0 0.0
    %214 = vmatpush2.xpose.msra.mxu0 0.0
    %215 = vmatprep.subr.mxu0 0.0
    %216 = vmatpush2.xpose.msra.mxu0 0.0
    %217 = vmatprep.subr.mxu0 0.0
    %218 = vmatpush2.xpose.msra.mxu0 0.0
    %219 = vmatprep.subr.mxu0 0.0
    %220 = vmatpush2.xpose.msra.mxu0 0.0
    %221 = vmatprep.subr.mxu0 0.0
    %222 = vmatpush2.xpose.msra.mxu0 0.0
    %223 = vmatprep.subr.mxu0 0.0
    %224 = vmatpush2.xpose.msra.mxu0 0.0
    %225 = vmatprep.subr.mxu0 0.0
    %226 = vmatpush2.xpose.msra.mxu0 0.0
    %227 = vmatprep.subr.mxu0 0.0
    %228 = vmatpush2.xpose.msra.mxu0 0.0
    %229 = vmatprep.subr.mxu0 0.0
    %230 = vmatpush2.xpose.msra.mxu0 0.0
    %231 = vmatprep.mubr.f32.mxu0 0.0
    %232 = vmatmul.mubr.f32.gmra.mxu0 %v150
    %v233 = vpop.f32.mrf.mxu0
    %v234 = vadd.f32 0.0, %v233
    %v235 = vpop.f32.mrf.mxu0
    %236 = vdwg.mxu0
    %v237 = vadd.f32 %v149, %v234
    %238 = vst [vmem:[#allocation22] sm:$0xff] %v237
    // Predicated region
    $region26: #{grad_linear.2} parent=1 // pred_check
      %p239 = pneg %p144
    $region27: #{grad_linear.2} parent=1 // pred_check_branch
      %241 = sbr.rel (%p239) target = $region29
    $region28: #{grad_linear.2} parent=1 // pred_region
      %v242 = vld [vmem:[#allocation22] sm:$0xff]
      %v243 = vld [vmem:[#allocation25] sm:$0x1]
      %v245 = vlaneseq
      %v246 = vshrl.u32 %v245, 7
      %v247 = vsub.s32 0, %v246
      %v248 = vrot.slane %v243, %v247
      %v250 = vadd.f32 %v242, %v248
      %251 = vst [vmem:[#allocation22] sm:$0xff] %v250
    $region29: #{grad_linear.2} parent=1 // pred_fallthru
      _
    // Predicated region
    $region30: #{grad_linear.2} parent=1 // pred_check
      _
    $region31: #{grad_linear.2} parent=1 // pred_check_branch
      %253 = sbr.rel (0) target = $region33
    $region32: #{grad_linear.2} parent=1 // pred_region
      %s255 = ssub.s32 128, 128
      %256 = vsyncadd [#allocation19], %s255
      %s258 = sshll.u32 [#allocation22], 4
      %s259 = int_to_ptr.vmem [resolvable:$true] %s258
      %261 = dma.vmem_to_hbm [thread:$0]  %s259, 128, %s4, [#allocation19]
    $region33: #{grad_linear.2} parent=1 // pred_fallthru
      _
    // Predicated region
    $region34: #{grad_linear.2} parent=1 // pred_check
      _
    $region35: #{grad_linear.2} parent=1 // pred_check_branch
      %263 = sbr.rel (0) target = $region37
    $region36: #{grad_linear.2} parent=1 // pred_region
      %264 = dma.done [#allocation19], 128
    $region37: #{grad_linear.2} parent=1 // pred_fallthru
      _
    %265 = vsyncpa [#allocation18], 1
    %266 = vsyncpa [#allocation21], 1
    %267 = vsyncpa [#allocation19], 1

</llo_original>
